<compile_context>
chip_gen: v5e
topology: v5e:2x2
jax: 0.10.0
libtpu: 0.0.40
codegen_flags: <defaults>
</compile_context>

<pallas_src>
import functools

import jax
import jax.numpy as jnp
from jax.experimental import pallas as pl
from jax.experimental.pallas import tpu as pltpu

_LANE = 128      # lane width (last dim)
_SUBLANE = 8     # sublane width for f32 (second-to-last dim)


def _round_up(x: int, m: int) -> int:
    return (x + m - 1) // m * m


def _cdiv(a: int, b: int) -> int:
    return (a + b - 1) // b


def _fused_mlp_kernel(x_ref, *refs, n_layers: int):
    """One batch tile through the whole MLP (all layers fused).

    refs = (w0, b0, w1, b1, ..., w_{L-1}, b_{L-1}, o_ref).
    SiLU (y * sigmoid(y)) after every layer except the last, matching the
    PyTorch Net.forward. Dots run in bf16 on the MXU with f32 accumulation;
    bias-add + SiLU stay in f32.
    """
    o_ref = refs[-1]
    wb = refs[:-1]
    h = x_ref[...].astype(jnp.bfloat16)
    for i in range(n_layers):
        w = wb[2 * i][...]                          # bf16 (fan_in, fan_out)
        b = wb[2 * i + 1][...]                      # f32  (1, fan_out)
        y = jnp.dot(h, w, preferred_element_type=jnp.float32) + b
        if i < n_layers - 1:
            y = y * jax.nn.sigmoid(y)               # SiLU in f32 (EUP)
            h = y.astype(jnp.bfloat16)
        else:
            h = y
    o_ref[...] = h.astype(o_ref.dtype)


def init_net_params(key, input_n, NL, NN, Nout):
    """Deterministic init mimicking PyTorch nn.Linear defaults
    (uniform(-1/sqrt(fan_in), 1/sqrt(fan_in))). Weights stored as (in, out)."""
    params = []
    dims = [(input_n, NN)] + [(NN, NN)] * (NL - 1) + [(NN, Nout)]
    for fan_in, fan_out in dims:
        key, wk, bk = jax.random.split(key, 3)
        bound = 1.0 / jnp.sqrt(jnp.float32(fan_in))
        w = jax.random.uniform(wk, (fan_in, fan_out), jnp.float32, -bound, bound)
        b = jax.random.uniform(bk, (fan_out,), jnp.float32, -bound, bound)
        params.append((w, b))
    return params


def make_net_forward(params, input_n, *, tile_m=512, min_tiles=2):
    """Preprocess params once (bf16 weights, lane-dense final layer) and
    return a jitted fused forward fn. `tile_m` is worth sweeping per
    generation (512-1024 on v5e/v6e, 256-512 on v7x)."""
    n_layers = len(params)
    nout = params[-1][0].shape[1]
    out_p = _round_up(nout, _LANE)        # lane-dense final store

    wb = []          # interleaved [w0, b0, w1, b1, ...]
    true_dims = []   # true (fan_in, fan_out) per layer, for the cost estimate
    for li, (w, b) in enumerate(params):
        fi, fo = w.shape
        true_dims.append((fi, fo))
        if li == n_layers - 1 and fo != out_p:
            # Pad ONLY the final fan-out to 128 (zero cols / zero bias lanes)
            # so the single output store is unmasked and lane-dense.
            w = jnp.zeros((fi, out_p), jnp.float32).at[:, :fo].set(w)
            b = jnp.zeros((1, out_p), jnp.float32).at[:, :fo].set(b)
        else:
            b = b.reshape(1, fo)
        wb.append(w.astype(jnp.bfloat16))   # bf16 dot inputs (MXU-native)
        wb.append(b.astype(jnp.float32))    # bias-add stays in f32

    kernel = functools.partial(_fused_mlp_kernel, n_layers=n_layers)

    # Per-chip VMEM capacity (v7x: 64 MiB per TC; v5e/v6e: 128 MiB).
    try:
        vmem_cap = int(pltpu.get_tpu_info().vmem_capacity_bytes)
    except Exception:
        vmem_cap = 64 * 1024 * 1024

    weight_bytes = sum(int(a.size) * a.dtype.itemsize for a in wb)
    max_width = max([input_n] + [int(a.shape[-1]) for a in wb[::2]])

    def forward(x):
        batch, f_in = x.shape
        assert f_in == input_n, "input feature mismatch"

        # Batch tiling: pad at most one sublane group; use >=2 grid steps
        # when the batch allows it so both v7x TensorCores get work.
        n_tiles = _cdiv(batch, tile_m)
        if batch >= min_tiles * _SUBLANE:
            n_tiles = max(n_tiles, min_tiles)
        bm = _round_up(_cdiv(batch, n_tiles), _SUBLANE)
        n_tiles = _cdiv(batch, bm)
        b_pad = n_tiles * bm

        # Only materialize a padded copy of x when the batch isn't aligned.
        xp = x if b_pad == batch else jnp.pad(x, ((0, b_pad - batch), (0, 0)))

        # x tiles over the batch; weights/biases are full-array blocks,
        # resident across all tiles, single-buffered (constant index_map).
        in_specs = [pl.BlockSpec((bm, input_n), lambda i: (i, 0))]
        for a in wb:
            in_specs.append(
                pl.BlockSpec(a.shape, lambda i: (0, 0),
                             pipeline_mode=pl.Buffered(1)))

        # VMEM limit: actual resident bytes + headroom, capped by chip VMEM.
        # TODO(synk): for very large NN on v7x (64 MiB VMEM), split the K dim
        # over an extra "arbitrary" grid axis with an f32 VMEM accumulator
        # instead of keeping the full weight set resident.
        resident = (
            2 * bm * input_n * 4          # x tile, double-buffered, f32
            + 2 * bm * out_p * 4          # output tile, double-buffered, f32
            + weight_bytes                # bf16 weights + f32 biases, 1 buffer
            + 4 * bm * max_width * 4      # intermediate-activation headroom
        )
        vmem_limit = min(max(int(resident * 1.25), 16 * 1024 * 1024),
                         int(vmem_cap * 0.75))

        # Advisory cost from true (unpadded) dims.
        flops = 2 * b_pad * sum(fi * fo for fi, fo in true_dims)
        transcendentals = b_pad * sum(fo for _, fo in true_dims[:-1])
        bytes_accessed = b_pad * input_n * 4 + b_pad * out_p * 4 + weight_bytes

        yp = pl.pallas_call(
            kernel,
            out_shape=jax.ShapeDtypeStruct((b_pad, out_p), jnp.float32),
            grid=(n_tiles,),
            in_specs=in_specs,
            out_specs=pl.BlockSpec((bm, out_p), lambda i: (i, 0)),
            compiler_params=pltpu.CompilerParams(
                dimension_semantics=("parallel",),
                vmem_limit_bytes=vmem_limit,
            ),
            cost_estimate=pl.CostEstimate(
                flops=int(flops),
                transcendentals=int(transcendentals),
                bytes_accessed=int(bytes_accessed),
            ),
        )(xp, *wb)

        # Slice away batch padding and the lane-padded output columns.
        return yp[:batch, :nout]

    return jax.jit(forward)


def _reference_forward(x, params):
    """Pure-JAX f32 reference for the correctness check."""
    o = x
    for w, b in params[:-1]:
        o = o @ w + b
        o = o * jax.nn.sigmoid(o)
    w, b = params[-1]
    return o @ w + b


if __name__ == "__main__":
    # Small shapes consistent with Net(input_n, NL, NN, Nout)
    batch, input_n, NL, NN, Nout = 8, 16, 3, 32, 4

    key = jax.random.PRNGKey(0)
    key, xk = jax.random.split(key)
    x = jax.random.normal(xk, (batch, input_n), jnp.float32)
    params = init_net_params(key, input_n, NL, NN, Nout)

    net_forward = make_net_forward(params, input_n)

    out = net_forward(x)
    out = jax.block_until_ready(out)

    ref = _reference_forward(x, params)
    assert out.shape == (batch, Nout)
    # bf16 matmul inputs with f32 accumulation -> relaxed tolerance.
    assert jnp.allclose(out, ref, atol=5e-2, rtol=5e-2), "mismatch vs reference"

    print("KERNEL_OK")
</pallas_src>

<mosaic_0001>
module attributes {stable_mosaic.version = 11 : i64} {
  func.func @_fused_mlp_kernel(%arg0: i32, %arg1: memref<8x16xf32, #tpu.memory_space<vmem>>, %arg2: memref<16x32xbf16, #tpu.memory_space<vmem>>, %arg3: memref<1x32xf32, #tpu.memory_space<vmem>>, %arg4: memref<32x32xbf16, #tpu.memory_space<vmem>>, %arg5: memref<1x32xf32, #tpu.memory_space<vmem>>, %arg6: memref<32x32xbf16, #tpu.memory_space<vmem>>, %arg7: memref<1x32xf32, #tpu.memory_space<vmem>>, %arg8: memref<32x128xbf16, #tpu.memory_space<vmem>>, %arg9: memref<1x128xf32, #tpu.memory_space<vmem>>, %arg10: memref<8x128xf32, #tpu.memory_space<vmem>>) attributes {dimension_semantics = [#tpu.dimension_semantics<parallel>], iteration_bounds = array<i64: 1>, scalar_prefetch = 0 : i64, scratch_operands = 0 : i64, tpu.core_type = #tpu.core_type<tc>, window_params = [{transform_indices = @transform_0, window_bounds = array<i64: 8, 16>}, {pipeline_mode = #tpu.pipeline_mode<synchronous>, transform_indices = @transform_1, window_bounds = array<i64: 16, 32>}, {pipeline_mode = #tpu.pipeline_mode<synchronous>, transform_indices = @transform_2, window_bounds = array<i64: 1, 32>}, {pipeline_mode = #tpu.pipeline_mode<synchronous>, transform_indices = @transform_3, window_bounds = array<i64: 32, 32>}, {pipeline_mode = #tpu.pipeline_mode<synchronous>, transform_indices = @transform_4, window_bounds = array<i64: 1, 32>}, {pipeline_mode = #tpu.pipeline_mode<synchronous>, transform_indices = @transform_5, window_bounds = array<i64: 32, 32>}, {pipeline_mode = #tpu.pipeline_mode<synchronous>, transform_indices = @transform_6, window_bounds = array<i64: 1, 32>}, {pipeline_mode = #tpu.pipeline_mode<synchronous>, transform_indices = @transform_7, window_bounds = array<i64: 32, 128>}, {pipeline_mode = #tpu.pipeline_mode<synchronous>, transform_indices = @transform_8, window_bounds = array<i64: 1, 128>}, {transform_indices = @transform_9, window_bounds = array<i64: 8, 128>}]} {
    %c0 = arith.constant 0 : index
    %c0_0 = arith.constant 0 : index
    %0 = vector.load %arg1[%c0, %c0_0] : memref<8x16xf32, #tpu.memory_space<vmem>>, vector<8x16xf32>
    %1 = arith.truncf %0 : vector<8x16xf32> to vector<8x16xbf16>
    %c0_1 = arith.constant 0 : index
    %c0_2 = arith.constant 0 : index
    %2 = vector.load %arg2[%c0_1, %c0_2] : memref<16x32xbf16, #tpu.memory_space<vmem>>, vector<16x32xbf16>
    %c0_3 = arith.constant 0 : index
    %c0_4 = arith.constant 0 : index
    %3 = vector.load %arg3[%c0_3, %c0_4] : memref<1x32xf32, #tpu.memory_space<vmem>>, vector<1x32xf32>
    %cst = arith.constant dense<0.000000e+00> : vector<8x32xf32>
    %4 = tpu.matmul %1, %2, %cst {dimension_numbers = #tpu.dot_dimension_numbers<[1], [0], [0], [1], [0, 0, 1, 1], [], []>} : vector<8x16xbf16>, vector<16x32xbf16>, vector<8x32xf32> -> vector<8x32xf32>
    %5 = vector.broadcast %3 : vector<1x32xf32> to vector<8x32xf32>
    %6 = arith.addf %4, %5 : vector<8x32xf32>
    %7 = arith.negf %6 : vector<8x32xf32>
    %8 = math.exp %7 : vector<8x32xf32>
    %cst_5 = arith.constant 1.000000e+00 : f32
    %9 = vector.broadcast %cst_5 : f32 to vector<8x32xf32>
    %10 = arith.addf %9, %8 : vector<8x32xf32>
    %11 = arith.divf %9, %10 : vector<8x32xf32>
    %12 = arith.mulf %6, %11 : vector<8x32xf32>
    %13 = arith.truncf %12 : vector<8x32xf32> to vector<8x32xbf16>
    %c0_6 = arith.constant 0 : index
    %c0_7 = arith.constant 0 : index
    %14 = vector.load %arg4[%c0_6, %c0_7] : memref<32x32xbf16, #tpu.memory_space<vmem>>, vector<32x32xbf16>
    %c0_8 = arith.constant 0 : index
    %c0_9 = arith.constant 0 : index
    %15 = vector.load %arg5[%c0_8, %c0_9] : memref<1x32xf32, #tpu.memory_space<vmem>>, vector<1x32xf32>
    %cst_10 = arith.constant dense<0.000000e+00> : vector<8x32xf32>
    %16 = tpu.matmul %13, %14, %cst_10 {dimension_numbers = #tpu.dot_dimension_numbers<[1], [0], [0], [1], [0, 0, 1, 1], [], []>} : vector<8x32xbf16>, vector<32x32xbf16>, vector<8x32xf32> -> vector<8x32xf32>
    %17 = vector.broadcast %15 : vector<1x32xf32> to vector<8x32xf32>
    %18 = arith.addf %16, %17 : vector<8x32xf32>
    %19 = arith.negf %18 : vector<8x32xf32>
    %20 = math.exp %19 : vector<8x32xf32>
    %cst_11 = arith.constant 1.000000e+00 : f32
    %21 = vector.broadcast %cst_11 : f32 to vector<8x32xf32>
    %22 = arith.addf %21, %20 : vector<8x32xf32>
    %23 = arith.divf %21, %22 : vector<8x32xf32>
    %24 = arith.mulf %18, %23 : vector<8x32xf32>
    %25 = arith.truncf %24 : vector<8x32xf32> to vector<8x32xbf16>
    %c0_12 = arith.constant 0 : index
    %c0_13 = arith.constant 0 : index
    %26 = vector.load %arg6[%c0_12, %c0_13] : memref<32x32xbf16, #tpu.memory_space<vmem>>, vector<32x32xbf16>
    %c0_14 = arith.constant 0 : index
    %c0_15 = arith.constant 0 : index
    %27 = vector.load %arg7[%c0_14, %c0_15] : memref<1x32xf32, #tpu.memory_space<vmem>>, vector<1x32xf32>
    %cst_16 = arith.constant dense<0.000000e+00> : vector<8x32xf32>
    %28 = tpu.matmul %25, %26, %cst_16 {dimension_numbers = #tpu.dot_dimension_numbers<[1], [0], [0], [1], [0, 0, 1, 1], [], []>} : vector<8x32xbf16>, vector<32x32xbf16>, vector<8x32xf32> -> vector<8x32xf32>
    %29 = vector.broadcast %27 : vector<1x32xf32> to vector<8x32xf32>
    %30 = arith.addf %28, %29 : vector<8x32xf32>
    %31 = arith.negf %30 : vector<8x32xf32>
    %32 = math.exp %31 : vector<8x32xf32>
    %cst_17 = arith.constant 1.000000e+00 : f32
    %33 = vector.broadcast %cst_17 : f32 to vector<8x32xf32>
    %34 = arith.addf %33, %32 : vector<8x32xf32>
    %35 = arith.divf %33, %34 : vector<8x32xf32>
    %36 = arith.mulf %30, %35 : vector<8x32xf32>
    %37 = arith.truncf %36 : vector<8x32xf32> to vector<8x32xbf16>
    %c0_18 = arith.constant 0 : index
    %c0_19 = arith.constant 0 : index
    %38 = vector.load %arg8[%c0_18, %c0_19] : memref<32x128xbf16, #tpu.memory_space<vmem>>, vector<32x128xbf16>
    %c0_20 = arith.constant 0 : index
    %c0_21 = arith.constant 0 : index
    %39 = vector.load %arg9[%c0_20, %c0_21] : memref<1x128xf32, #tpu.memory_space<vmem>>, vector<1x128xf32>
    %cst_22 = arith.constant dense<0.000000e+00> : vector<8x128xf32>
    %40 = tpu.matmul %37, %38, %cst_22 {dimension_numbers = #tpu.dot_dimension_numbers<[1], [0], [0], [1], [0, 0, 1, 1], [], []>} : vector<8x32xbf16>, vector<32x128xbf16>, vector<8x128xf32> -> vector<8x128xf32>
    %41 = vector.broadcast %39 : vector<1x128xf32> to vector<8x128xf32>
    %42 = arith.addf %40, %41 : vector<8x128xf32>
    %c0_23 = arith.constant 0 : index
    %c0_24 = arith.constant 0 : index
    %43 = vector.load %arg10[%c0_23, %c0_24] : memref<8x128xf32, #tpu.memory_space<vmem>>, vector<8x128xf32>
    tpu.vector_store %arg10[%c0_23, %c0_24], %42 {strides = array<i32>} : memref<8x128xf32, #tpu.memory_space<vmem>>, vector<8x128xf32>,
    return
  }
  func.func @transform_0(%arg0: i32) -> (i32, i32) {
    %c0_i32 = arith.constant 0 : i32
    %c0_i32_0 = arith.constant 0 : i32
    return %arg0, %c0_i32 : i32, i32
  }
  func.func @transform_1(%arg0: i32) -> (i32, i32) {
    %c0_i32 = arith.constant 0 : i32
    %c0_i32_0 = arith.constant 0 : i32
    %c0_i32_1 = arith.constant 0 : i32
    return %c0_i32, %c0_i32_0 : i32, i32
  }
  func.func @transform_2(%arg0: i32) -> (i32, i32) {
    %c0_i32 = arith.constant 0 : i32
    %c0_i32_0 = arith.constant 0 : i32
    %c0_i32_1 = arith.constant 0 : i32
    return %c0_i32, %c0_i32_0 : i32, i32
  }
  func.func @transform_3(%arg0: i32) -> (i32, i32) {
    %c0_i32 = arith.constant 0 : i32
    %c0_i32_0 = arith.constant 0 : i32
    %c0_i32_1 = arith.constant 0 : i32
    return %c0_i32, %c0_i32_0 : i32, i32
  }
  func.func @transform_4(%arg0: i32) -> (i32, i32) {
    %c0_i32 = arith.constant 0 : i32
    %c0_i32_0 = arith.constant 0 : i32
    %c0_i32_1 = arith.constant 0 : i32
    return %c0_i32, %c0_i32_0 : i32, i32
  }
  func.func @transform_5(%arg0: i32) -> (i32, i32) {
    %c0_i32 = arith.constant 0 : i32
    %c0_i32_0 = arith.constant 0 : i32
    %c0_i32_1 = arith.constant 0 : i32
    return %c0_i32, %c0_i32_0 : i32, i32
  }
  func.func @transform_6(%arg0: i32) -> (i32, i32) {
    %c0_i32 = arith.constant 0 : i32
    %c0_i32_0 = arith.constant 0 : i32
    %c0_i32_1 = arith.constant 0 : i32
    return %c0_i32, %c0_i32_0 : i32, i32
  }
  func.func @transform_7(%arg0: i32) -> (i32, i32) {
    %c0_i32 = arith.constant 0 : i32
    %c0_i32_0 = arith.constant 0 : i32
    %c0_i32_1 = arith.constant 0 : i32
    return %c0_i32, %c0_i32_0 : i32, i32
  }
  func.func @transform_8(%arg0: i32) -> (i32, i32) {
    %c0_i32 = arith.constant 0 : i32
    %c0_i32_0 = arith.constant 0 : i32
    %c0_i32_1 = arith.constant 0 : i32
    return %c0_i32, %c0_i32_0 : i32, i32
  }
  func.func @transform_9(%arg0: i32) -> (i32, i32) {
    %c0_i32 = arith.constant 0 : i32
    %c0_i32_0 = arith.constant 0 : i32
    return %arg0, %c0_i32 : i32, i32
  }
}

</mosaic_0001>

<llo_original>
// kernel: forward.1
$region0: #{forward.1}
  #allocation0 [shape = 'u32[]', space=smem, size = 0x4, offset = 0x4, fixed_abs, tag = 'smem constant byte address 0x4 - core index']
  #allocation1 [shape = 'u32[72,128]{1,0:T(1,128)}', space=vmem, size = 0x9000, scoped, tag = 'internal scratch']
  %s0 = inlined_call_operand.hbm [shape: f32[8,16], index: 0, kind: input, shape index: {}]
  %s1 = inlined_call_operand.hbm [shape: bf16[16,32], index: 1, kind: input, shape index: {}]
  %s2 = inlined_call_operand.hbm [shape: f32[1,32], index: 2, kind: input, shape index: {}]
  %s3 = inlined_call_operand.hbm [shape: bf16[32,32], index: 3, kind: input, shape index: {}]
  %s4 = inlined_call_operand.vmem [shape: f32[1,32], index: 4, kind: input, shape index: {}]
  %s5 = inlined_call_operand.hbm [shape: bf16[32,32], index: 5, kind: input, shape index: {}]
  %s6 = inlined_call_operand.vmem [shape: f32[1,32], index: 6, kind: input, shape index: {}]
  %s7 = inlined_call_operand.hbm [shape: bf16[32,128], index: 7, kind: input, shape index: {}]
  %s8 = inlined_call_operand.vmem [shape: f32[1,128], index: 8, kind: input, shape index: {}]
  %s9 = inlined_call_operand.vmem [shape: f32[8,128], index: 9, kind: output, shape index: {}]
  %s10 = sld [smem:[#allocation0]]
  $region70: #{forward.1} parent=0
    _
  %s12 = ssub.s32 1, %s10
  %s13 = scalar_select 0, %s12, %s10
  $region1: #{forward.1} parent=0
    #allocation2 [shape = 'u8[4096]{0}', space=vmem, size = 0x1000, scoped, tag = 'input window, operand 0, single buffered']
    #allocation3 [shape = 's32[1]{0}', space=sflag, size = 0x4, scoped, tag = 'scoped memory for forward.1']
    #allocation4 [shape = 'u8[4096]{0}', space=vmem, size = 0x1000, scoped, tag = 'input window, operand 1, single buffered']
    #allocation5 [shape = 's32[1]{0}', space=sflag, size = 0x4, scoped, tag = 'scoped memory for forward.1']
    #allocation6 [shape = 'u8[512]{0}', space=vmem, size = 0x400, scoped, tag = 'input window, operand 2, single buffered']
    #allocation7 [shape = 'u8[8192]{0}', space=vmem, size = 0x2000, scoped, tag = 'input window, operand 3, single buffered']
    #allocation8 [shape = 's32[1]{0}', space=sflag, size = 0x4, scoped, tag = 'scoped memory for forward.1']
    #allocation9 [shape = 'u8[8192]{0}', space=vmem, size = 0x2000, scoped, tag = 'input window, operand 5, single buffered']
    #allocation10 [shape = 'u8[8192]{0}', space=vmem, size = 0x2000, scoped, tag = 'input window, operand 7, single buffered']
    #allocation11 [shape = 's32[1]{0}', space=sflag, size = 0x4, scoped, tag = 'scoped memory for forward.1']
    %14 = vsyncpa [#allocation3], 0
    %15 = vsyncpa [#allocation5], 0
    %16 = vsyncpa [#allocation8], 0
    %17 = vsyncpa [#allocation11], 0
    // Predicated region
    $region2: #{forward.1} parent=1 // pred_check
      _
    $region3: #{forward.1} parent=1 // pred_check_branch
      %19 = sbr.rel (0) target = $region5
    $region4: #{forward.1} parent=1 // pred_region
      %21 = vsyncadd [#allocation3], 0
      %s23 = sshll.u32 %s0, 4
      %s24 = int_to_ptr.hbm [resolvable:$true] %s23
      %s25 = sshll.u32 [#allocation2], 4
      %s26 = int_to_ptr.vmem [resolvable:$true] %s25
      %28 = dma.hbm_to_vmem [thread:$0]  %s24, 128, %s26, [#allocation3]
    $region5: #{forward.1} parent=1 // pred_fallthru
      _
    // Predicated region
    $region6: #{forward.1} parent=1 // pred_check
      _
    $region7: #{forward.1} parent=1 // pred_check_branch
      %30 = sbr.rel (0) target = $region9
    $region8: #{forward.1} parent=1 // pred_region
      %32 = vsyncadd [#allocation5], 0
      %s33 = sshll.u32 %s1, 4
      %s34 = int_to_ptr.hbm [resolvable:$true] %s33
      %s35 = sshll.u32 [#allocation4], 4
      %s36 = int_to_ptr.vmem [resolvable:$true] %s35
      %41 = dma.hbm_to_vmem [thread:$0]  %s34, 128, %s36, [#allocation5], 64, 64, 4
    $region9: #{forward.1} parent=1 // pred_fallthru
      _
    // Predicated region
    $region10: #{forward.1} parent=1 // pred_check
      _
    $region11: #{forward.1} parent=1 // pred_check_branch
      %43 = sbr.rel (0) target = $region13
    $region12: #{forward.1} parent=1 // pred_region
      %45 = vsyncadd [#allocation5], 0
      %s47 = sshll.u32 %s2, 4
      %s48 = int_to_ptr.hbm [resolvable:$true] %s47
      %s49 = sshll.u32 [#allocation6], 4
      %s50 = int_to_ptr.vmem [resolvable:$true] %s49
      %52 = dma.hbm_to_vmem [thread:$0]  %s48, 16, %s50, [#allocation5]
    $region13: #{forward.1} parent=1 // pred_fallthru
      _
    // Predicated region
    $region14: #{forward.1} parent=1 // pred_check
      _
    $region15: #{forward.1} parent=1 // pred_check_branch
      %54 = sbr.rel (0) target = $region17
    $region16: #{forward.1} parent=1 // pred_region
      %56 = vsyncadd [#allocation8], 0
      %s57 = sshll.u32 %s3, 4
      %s58 = int_to_ptr.hbm [resolvable:$true] %s57
      %s59 = sshll.u32 [#allocation7], 4
      %s60 = int_to_ptr.vmem [resolvable:$true] %s59
      %65 = dma.hbm_to_vmem [thread:$0]  %s58, 256, %s60, [#allocation8], 64, 64, 4
    $region17: #{forward.1} parent=1 // pred_fallthru
      _
    // Predicated region
    $region18: #{forward.1} parent=1 // pred_check
      _
    $region19: #{forward.1} parent=1 // pred_check_branch
      %67 = sbr.rel (0) target = $region21
    $region20: #{forward.1} parent=1 // pred_region
      _
    $region21: #{forward.1} parent=1 // pred_fallthru
      _
    // Predicated region
    $region22: #{forward.1} parent=1 // pred_check
      _
    $region23: #{forward.1} parent=1 // pred_check_branch
      %69 = sbr.rel (0) target = $region25
    $region24: #{forward.1} parent=1 // pred_region
      %71 = vsyncadd [#allocation8], 0
      %s72 = sshll.u32 %s5, 4
      %s73 = int_to_ptr.hbm [resolvable:$true] %s72
      %s74 = sshll.u32 [#allocation9], 4
      %s75 = int_to_ptr.vmem [resolvable:$true] %s74
      %80 = dma.hbm_to_vmem [thread:$0]  %s73, 256, %s75, [#allocation8], 64, 64, 4
    $region25: #{forward.1} parent=1 // pred_fallthru
      _
    // Predicated region
    $region26: #{forward.1} parent=1 // pred_check
      _
    $region27: #{forward.1} parent=1 // pred_check_branch
      %82 = sbr.rel (0) target = $region29
    $region28: #{forward.1} parent=1 // pred_region
      _
    $region29: #{forward.1} parent=1 // pred_fallthru
      _
    // Predicated region
    $region30: #{forward.1} parent=1 // pred_check
      _
    $region31: #{forward.1} parent=1 // pred_check_branch
      %84 = sbr.rel (0) target = $region33
    $region32: #{forward.1} parent=1 // pred_region
      %86 = vsyncadd [#allocation11], 0
      %s87 = sshll.u32 %s7, 4
      %s88 = int_to_ptr.hbm [resolvable:$true] %s87
      %s89 = sshll.u32 [#allocation10], 4
      %s90 = int_to_ptr.vmem [resolvable:$true] %s89
      %95 = dma.hbm_to_vmem [thread:$0]  %s88, 256, %s90, [#allocation11], 64, 64, 4
    $region33: #{forward.1} parent=1 // pred_fallthru
      _
    // Predicated region
    $region34: #{forward.1} parent=1 // pred_check
      _
    $region35: #{forward.1} parent=1 // pred_check_branch
      %97 = sbr.rel (0) target = $region37
    $region36: #{forward.1} parent=1 // pred_region
      _
    $region37: #{forward.1} parent=1 // pred_fallthru
      _
    // Predicated region
    $region38: #{forward.1} parent=1 // pred_check
      _
    $region39: #{forward.1} parent=1 // pred_check_branch
      %99 = sbr.rel (0) target = $region41
    $region40: #{forward.1} parent=1 // pred_region
      %101 = dma.done [#allocation3], 128
    $region41: #{forward.1} parent=1 // pred_fallthru
      _
    // Predicated region
    $region42: #{forward.1} parent=1 // pred_check
      _
    $region43: #{forward.1} parent=1 // pred_check_branch
      %103 = sbr.rel (0) target = $region45
    $region44: #{forward.1} parent=1 // pred_region
      %105 = dma.done [#allocation5], 128
    $region45: #{forward.1} parent=1 // pred_fallthru
      _
    // Predicated region
    $region46: #{forward.1} parent=1 // pred_check
      _
    $region47: #{forward.1} parent=1 // pred_check_branch
      %107 = sbr.rel (0) target = $region49
    $region48: #{forward.1} parent=1 // pred_region
      %109 = dma.done [#allocation5], 16
    $region49: #{forward.1} parent=1 // pred_fallthru
      _
    // Predicated region
    $region50: #{forward.1} parent=1 // pred_check
      _
    $region51: #{forward.1} parent=1 // pred_check_branch
      %111 = sbr.rel (0) target = $region53
    $region52: #{forward.1} parent=1 // pred_region
      %113 = dma.done [#allocation8], 256
    $region53: #{forward.1} parent=1 // pred_fallthru
      _
    // Predicated region
    $region54: #{forward.1} parent=1 // pred_check
      _
    $region55: #{forward.1} parent=1 // pred_check_branch
      %115 = sbr.rel (0) target = $region57
    $region56: #{forward.1} parent=1 // pred_region
      %117 = dma.done [#allocation8], 256
    $region57: #{forward.1} parent=1 // pred_fallthru
      _
    // Predicated region
    $region58: #{forward.1} parent=1 // pred_check
      _
    $region59: #{forward.1} parent=1 // pred_check_branch
      %119 = sbr.rel (0) target = $region61
    $region60: #{forward.1} parent=1 // pred_region
      %121 = dma.done [#allocation11], 256
    $region61: #{forward.1} parent=1 // pred_fallthru
      _
    %v123 = vld [vmem:[#allocation2] sm:$0xff]
    %v124 = vpack.c.bf16 %v123, %v123
    %v125 = vld [vmem:[#allocation4] sm:$0xf]
    %v126 = vld [vmem:[#allocation4 + $0x4] sm:$0xf]
    %v127 = vld [vmem:[#allocation6] sm:$0x1]
    %v129 = vperm.slane %v127, 0
    %v133 = vunpack.c.l.b16 %v125
    %v134 = vunpack.c.l.b16 %v126
    %v135 = vpack.c.b16 %v134, %v133
    %vm137 = vcmask 130048
    %v139 = vsel %vm137, %v124, 0
    %141 = vmatpush.bf16.msra.mxu0 0
    %142 = vmatpush.bf16.msra.mxu0 0
    %143 = vmatpush.bf16.msra.mxu0 0
    %144 = vmatpush.bf16.msra.mxu0 0
    %145 = vmatpush.bf16.msra.mxu0 0
    %146 = vmatpush.bf16.msra.mxu0 0
    %147 = vmatpush.bf16.msra.mxu0 0
    %148 = vmatpush.bf16.msra.mxu0 %v135
    %149 = vmatmul.bf16.gmra.mxu0 %v139
    %v150 = vpop.f32.mrf.mxu0
    %v151 = vadd.f32 %v129, %v150
    %v152 = vpop.f32.mrf.mxu0
    %153 = vdwg.mxu0
    %v154 = vxor.u32 %v151, 2147483648
    %v155 = vmul.f32 %v154, 1.442695
    %v156 = vpow.pop %v155
    %v157 = vadd.f32 %v156, 1.0
    %v158 = vrcp.pop %v157
    %v159 = vmul.f32 %v157, %v158
    %v160 = vsub.f32 1.0, %v159
    %v161 = vmul.f32 %v158, %v160
    %v162 = vadd.f32 %v158, %v161
    %vm163 = vweird.f32 %v157
    %vm164 = vweird.f32 %v158
    %vm165 = vmor %vm163, %vm164
    %v166 = vsel %vm165, %v158, %v162
    %v167 = vand.u32 2147483647, %v157
    %vm168 = vcmp.eq.f32.partialorder %v167, 8.507059e+37
    %v169 = vand.u32 %v157, 2147483648
    %v170 = vor.u32 1.1754944e-38, %v169
    %v171 = vsel %vm168, %v170, %v166
    %v172 = vmul.f32 1.0, %v171
    %v173 = vmul.f32 %v151, %v172
    %v174 = vpack.c.bf16 %v173, %v173
    %v175 = vld [vmem:[#allocation7] sm:$0xf]
    %v176 = vld [vmem:[#allocation7 + $0x4] sm:$0xf]
    %v177 = vld [vmem:[#allocation7 + $0x8] sm:$0xf]
    %v178 = vld [vmem:[#allocation7 + $0xc] sm:$0xf]
    %v179 = vld [vmem:[%s4] sm:$0x1]
    %v181 = vperm.slane %v179, 0
    %v187 = vunpack.c.l.b16 %v175
    %v188 = vunpack.c.l.b16 %v176
    %v189 = vunpack.c.l.b16 %v177
    %v190 = vunpack.c.l.b16 %v178
    %v191 = vpack.c.b16 %v188, %v187
    %v192 = vpack.c.b16 %v190, %v189
    %vm195 = vcmask 261120
    %v197 = vsel %vm195, %v174, 0
    %199 = vmatpush.bf16.msra.mxu0 0
    %200 = vmatpush.bf16.msra.mxu0 0
    %201 = vmatpush.bf16.msra.mxu0 0
    %202 = vmatpush.bf16.msra.mxu0 0
    %203 = vmatpush.bf16.msra.mxu0 0
    %204 = vmatpush.bf16.msra.mxu0 0
    %205 = vmatpush.bf16.msra.mxu0 %v192
    %206 = vmatpush.bf16.msra.mxu0 %v191
    %207 = vmatmul.bf16.gmra.mxu0 %v197
    %v208 = vpop.f32.mrf.mxu0
    %v209 = vadd.f32 %v181, %v208
    %v210 = vpop.f32.mrf.mxu0
    %211 = vdwg.mxu0
    %v212 = vxor.u32 %v209, 2147483648
    %v213 = vmul.f32 %v212, 1.442695
    %v214 = vpow.pop %v213
    %v215 = vadd.f32 %v214, 1.0
    %v216 = vrcp.pop %v215
    %v217 = vmul.f32 %v215, %v216
    %v218 = vsub.f32 1.0, %v217
    %v219 = vmul.f32 %v216, %v218
    %v220 = vadd.f32 %v216, %v219
    %vm221 = vweird.f32 %v215
    %vm222 = vweird.f32 %v216
    %vm223 = vmor %vm221, %vm222
    %v224 = vsel %vm223, %v216, %v220
    %v225 = vand.u32 2147483647, %v215
    %vm226 = vcmp.eq.f32.partialorder %v225, 8.507059e+37
    %v227 = vand.u32 %v215, 2147483648
    %v228 = vor.u32 1.1754944e-38, %v227
    %v229 = vsel %vm226, %v228, %v224
    %v230 = vmul.f32 1.0, %v229
    %v231 = vmul.f32 %v209, %v230
    %v232 = vpack.c.bf16 %v231, %v231
    %v233 = vld [vmem:[#allocation9] sm:$0xf]
    %v234 = vld [vmem:[#allocation9 + $0x4] sm:$0xf]
    %v235 = vld [vmem:[#allocation9 + $0x8] sm:$0xf]
    %v236 = vld [vmem:[#allocation9 + $0xc] sm:$0xf]
    %v237 = vld [vmem:[%s6] sm:$0x1]
    %v239 = vperm.slane %v237, 0
    %v245 = vunpack.c.l.b16 %v233
    %v246 = vunpack.c.l.b16 %v234
    %v247 = vunpack.c.l.b16 %v235
    %v248 = vunpack.c.l.b16 %v236
    %v249 = vpack.c.b16 %v246, %v245
    %v250 = vpack.c.b16 %v248, %v247
    %v254 = vsel %vm195, %v232, 0
    %256 = vmatpush.bf16.msra.mxu0 0
    %257 = vmatpush.bf16.msra.mxu0 0
    %258 = vmatpush.bf16.msra.mxu0 0
    %259 = vmatpush.bf16.msra.mxu0 0
    %260 = vmatpush.bf16.msra.mxu0 0
    %261 = vmatpush.bf16.msra.mxu0 0
    %262 = vmatpush.bf16.msra.mxu0 %v250
    %263 = vmatpush.bf16.msra.mxu0 %v249
    %264 = vmatmul.bf16.gmra.mxu0 %v254
    %v265 = vpop.f32.mrf.mxu0
    %v266 = vadd.f32 %v239, %v265
    %v267 = vpop.f32.mrf.mxu0
    %268 = vdwg.mxu0
    %v269 = vxor.u32 %v266, 2147483648
    %v270 = vmul.f32 %v269, 1.442695
    %v271 = vpow.pop %v270
    %v272 = vadd.f32 %v271, 1.0
    %v273 = vrcp.pop %v272
    %v274 = vmul.f32 %v272, %v273
    %v275 = vsub.f32 1.0, %v274
    %v276 = vmul.f32 %v273, %v275
    %v277 = vadd.f32 %v273, %v276
    %vm278 = vweird.f32 %v272
    %vm279 = vweird.f32 %v273
    %vm280 = vmor %vm278, %vm279
    %v281 = vsel %vm280, %v273, %v277
    %v282 = vand.u32 2147483647, %v272
    %vm283 = vcmp.eq.f32.partialorder %v282, 8.507059e+37
    %v284 = vand.u32 %v272, 2147483648
    %v285 = vor.u32 1.1754944e-38, %v284
    %v286 = vsel %vm283, %v285, %v281
    %v287 = vmul.f32 1.0, %v286
    %v288 = vmul.f32 %v266, %v287
    %v289 = vpack.c.bf16 %v288, %v288
    %v290 = vld [vmem:[#allocation10] sm:$0xf]
    %v291 = vld [vmem:[#allocation10 + $0x4] sm:$0xf]
    %v292 = vld [vmem:[#allocation10 + $0x8] sm:$0xf]
    %v293 = vld [vmem:[#allocation10 + $0xc] sm:$0xf]
    %v294 = vld [vmem:[%s8] sm:$0x1]
    %v296 = vperm.slane %v294, 0
    %v302 = vunpack.c.l.b16 %v290
    %v303 = vunpack.c.l.b16 %v291
    %v304 = vunpack.c.l.b16 %v292
    %v305 = vunpack.c.l.b16 %v293
    %v306 = vpack.c.b16 %v303, %v302
    %v307 = vpack.c.b16 %v305, %v304
    %v311 = vsel %vm195, %v289, 0
    %313 = vmatpush.bf16.msra.mxu0 0
    %314 = vmatpush.bf16.msra.mxu0 0
    %315 = vmatpush.bf16.msra.mxu0 0
    %316 = vmatpush.bf16.msra.mxu0 0
    %317 = vmatpush.bf16.msra.mxu0 0
    %318 = vmatpush.bf16.msra.mxu0 0
    %319 = vmatpush.bf16.msra.mxu0 %v307
    %320 = vmatpush.bf16.msra.mxu0 %v306
    %321 = vmatmul.bf16.gmra.mxu0 %v311
    %v322 = vpop.f32.mrf.mxu0
    %v323 = vadd.f32 %v296, %v322
    %v324 = vpop.f32.mrf.mxu0
    %325 = vdwg.mxu0
    %326 = vst [vmem:[%s9] sm:$0xff] %v323
    // Predicated region
    $region62: #{forward.1} parent=1 // pred_check
      _
    $region63: #{forward.1} parent=1 // pred_check_branch
      %328 = sbr.rel (0) target = $region65
    $region64: #{forward.1} parent=1 // pred_region
      _
    $region65: #{forward.1} parent=1 // pred_fallthru
      _
    // Predicated region
    $region66: #{forward.1} parent=1 // pred_check
      _
    $region67: #{forward.1} parent=1 // pred_check_branch
      %330 = sbr.rel (0) target = $region69
    $region68: #{forward.1} parent=1 // pred_region
      _
    $region69: #{forward.1} parent=1 // pred_fallthru
      _
    %331 = vsyncpa [#allocation3], 1
    %332 = vsyncpa [#allocation5], 1
    %333 = vsyncpa [#allocation8], 1
    %334 = vsyncpa [#allocation11], 1

</llo_original>
